<compile_context>
chip_gen: v5e
topology: v5e:2x2
jax: 0.10.0
libtpu: 0.0.40
codegen_flags: <defaults>
</compile_context>

<pallas_src>
import functools
import math

import jax
import jax.numpy as jnp
from jax import lax
from jax.experimental import pallas as pl
from jax.experimental.pallas import tpu as pltpu


# ----------------------------------------------------------------------------- helpers

def _layer_norm(x, gamma, beta, eps):
    # torch.nn.LayerNorm: biased variance, eps inside the sqrt. rsqrt -> EUP slot.
    mean = jnp.mean(x, axis=-1, keepdims=True)
    var = jnp.mean(jnp.square(x - mean), axis=-1, keepdims=True)
    return (x - mean) * lax.rsqrt(var + eps) * gamma + beta


def _erf(x):
    # Exact-erf GELU approximated with the Abramowitz&Stegun 7.1.26 polynomial
    # (|err| <= 1.5e-7); exp and the approx reciprocal both land on the EUP.
    ax = jnp.abs(x)
    t = pl.reciprocal(1.0 + 0.3275911 * ax, approx=True)
    poly = ((((1.061405429 * t - 1.453152027) * t + 1.421413741) * t
             - 0.284496736) * t + 0.254829592) * t
    y = 1.0 - poly * jnp.exp(-ax * ax)
    return jnp.where(x >= 0, y, -y)


def _gelu(x):
    return 0.5 * x * (1.0 + _erf(x * 0.7071067811865476))


# ----------------------------------------------------------------------------- embedding kernel
# Per-token grid; the word/token-type/position rows arrive via data-dependent BlockSpec
# index_maps (double-buffered prefetch for free), so the vocab table never sits in VMEM.

def _embedding_kernel(ids_ref, tts_ref,          # scalar-prefetch SMEM refs (unused in body)
                      w_ref,                     # (1, 1, H) gathered word row
                      t_ref,                     # (1, 1, H) gathered token-type row
                      p_ref,                     # (1, 1, H) position row
                      g_ref, b_ref,              # (1, H) LayerNorm affine
                      o_ref,                     # (1, 1, 1, H) output row
                      *, eps):
    del ids_ref, tts_ref
    x = w_ref[0] + t_ref[0] + p_ref[0]                           # (1, H)
    y = _layer_norm(x, g_ref[...], b_ref[...], eps)              # dropout(p=0) = identity
    o_ref[...] = y.reshape(o_ref.shape).astype(o_ref.dtype)


def trans_embedding(input_ids, token_type_ids, word_table, pos_table, tok_table,
                    gamma, beta, *, eps):
    B, S = input_ids.shape
    V, H = word_table.shape
    T, P = tok_table.shape[0], pos_table.shape[0]
    assert P >= S, "seq_length exceeds max_position_size"
    # Default position_ids = arange(S); explicit position_ids are not supported here.

    ids = input_ids.astype(jnp.int32)            # -> SMEM (scalar prefetch), drive index_maps
    tts = token_type_ids.astype(jnp.int32)

    grid_spec = pltpu.PrefetchScalarGridSpec(
        num_scalar_prefetch=2,
        grid=(B, S),
        in_specs=[
            pl.BlockSpec((1, 1, H), lambda b, s, ids, tts: (ids[b, s], 0, 0)),  # word row
            pl.BlockSpec((1, 1, H), lambda b, s, ids, tts: (tts[b, s], 0, 0)),  # token-type row
            pl.BlockSpec((1, 1, H), lambda b, s, ids, tts: (s, 0, 0)),          # position row
            pl.BlockSpec((1, H), lambda b, s, ids, tts: (0, 0)),                # LN gamma
            pl.BlockSpec((1, H), lambda b, s, ids, tts: (0, 0)),                # LN beta
        ],
        out_specs=pl.BlockSpec((1, 1, 1, H), lambda b, s, ids, tts: (b, s, 0, 0)),
    )
    out = pl.pallas_call(
        functools.partial(_embedding_kernel, eps=eps),
        out_shape=jax.ShapeDtypeStruct((B, S, 1, H), jnp.float32),
        grid_spec=grid_spec,
        compiler_params=pltpu.CompilerParams(
            dimension_semantics=("parallel", "parallel")),       # v7x megacore split
    )(ids, tts,
      word_table.reshape(V, 1, H),
      tok_table.reshape(T, 1, H),
      pos_table.reshape(P, 1, H),
      gamma, beta)
    return out.reshape(B * S, H)                                 # lane-dense activation slab


# ----------------------------------------------------------------------------- fused encoder + pooler

def _encoder_kernel(x_ref, bias_ref,
                    wqk_ref, bqk_ref, wo1_ref, bo1_ref, g1_ref, b1_ref,
                    wi_ref, bi_ref, wo2_ref, bo2_ref, g2_ref, b2_ref,
                    pw_ref, pb_ref,
                    h_ref, pooled_ref,
                    h_sc, ctx_sc,
                    *, batch, seq, num_heads, eps):
    l = pl.program_id(0)
    num_layers = pl.num_programs(0)
    N, H = h_ref.shape
    hd = H // num_heads
    scale = 1.0 / math.sqrt(hd)

    @pl.when(l == 0)
    def _():
        h_sc[...] = x_ref[...]                                   # seed the resident activation

    x = h_sc[...]                                                # (N, H)

    # Fused Q|K projection. NOTE: value reuses the key projection, faithfully reproducing the
    # reference (`value_states = self.key(hidden_states)`), so v == k and no third matmul.
    qk = jnp.dot(x, wqk_ref[0], preferred_element_type=jnp.float32) + bqk_ref[0]   # (N, 2H)
    qk3 = qk.reshape(batch, seq, 2 * H)
    bias = bias_ref[...][:, None, :]                             # (B, 1, S) additive mask bias

    # Per-head attention batched over the batch dim; heads written straight into a VMEM slab.
    for n in range(num_heads):                                   # static, small head count
        qn = qk3[:, :, n * hd:(n + 1) * hd]                      # (B, S, hd)
        kn = qk3[:, :, H + n * hd:H + (n + 1) * hd]              # (B, S, hd)  (== v)
        s = jnp.einsum('bqd,bkd->bqk', qn, kn,
                       preferred_element_type=jnp.float32) * scale + bias
        m = jnp.max(s, axis=-1, keepdims=True)
        e = jnp.exp(s - m)
        p = e * pl.reciprocal(jnp.sum(e, axis=-1, keepdims=True), approx=True)
        cn = jnp.einsum('bqk,bkd->bqd', p, kn,                   # dropout(p=0) = identity
                        preferred_element_type=jnp.float32)
        ctx_sc[:, n * hd:(n + 1) * hd] = cn.reshape(N, hd)

    ctx = ctx_sc[...]                                            # (N, H)

    # Attention output: dense + residual + LayerNorm.
    attn = jnp.dot(ctx, wo1_ref[0], preferred_element_type=jnp.float32) + bo1_ref[0]
    attn = _layer_norm(attn + x, g1_ref[0], b1_ref[0], eps)

    # Feed-forward: dense -> GELU -> dense + residual + LayerNorm.
    inter = _gelu(jnp.dot(attn, wi_ref[0], preferred_element_type=jnp.float32) + bi_ref[0])
    out = jnp.dot(inter, wo2_ref[0], preferred_element_type=jnp.float32) + bo2_ref[0]
    out = _layer_norm(out + attn, g2_ref[0], b2_ref[0], eps)

    h_sc[...] = out                                              # carry to the next layer
    h_ref[...] = out.astype(h_ref.dtype)                         # resident output block

    @pl.when(l == num_layers - 1)
    def _():
        # Pooler on the CLS rows, straight out of VMEM (no HBM re-read of the sequence).
        cls = out.reshape(batch, seq, H)[:, 0, :]                # (B, H)
        pooled = jnp.dot(cls, pw_ref[...], preferred_element_type=jnp.float32) + pb_ref[...]
        pooled_ref[...] = jnp.tanh(pooled).astype(pooled_ref.dtype)


def trans_encoder_pooler(h0, mask_bias, stacked, pool_w, pool_b,
                         *, batch, seq, num_heads, eps):
    N, H = h0.shape
    L = stacked["wqk"].shape[0]
    I = stacked["wi"].shape[-1]

    in_specs = (
        pl.BlockSpec((N, H), lambda l: (0, 0)),                  # embedding output (layer 0 seed)
        pl.BlockSpec((batch, seq), lambda l: (0, 0)),            # additive attention-mask bias
        pl.BlockSpec((1, H, 2 * H), lambda l: (l, 0, 0)),        # wqk  (prefetched per layer)
        pl.BlockSpec((1, 1, 2 * H), lambda l: (l, 0, 0)),        # bqk
        pl.BlockSpec((1, H, H), lambda l: (l, 0, 0)),            # wo1
        pl.BlockSpec((1, 1, H), lambda l: (l, 0, 0)),            # bo1
        pl.BlockSpec((1, 1, H), lambda l: (l, 0, 0)),            # g1
        pl.BlockSpec((1, 1, H), lambda l: (l, 0, 0)),            # b1
        pl.BlockSpec((1, H, I), lambda l: (l, 0, 0)),            # wi
        pl.BlockSpec((1, 1, I), lambda l: (l, 0, 0)),            # bi
        pl.BlockSpec((1, I, H), lambda l: (l, 0, 0)),            # wo2
        pl.BlockSpec((1, 1, H), lambda l: (l, 0, 0)),            # bo2
        pl.BlockSpec((1, 1, H), lambda l: (l, 0, 0)),            # g2
        pl.BlockSpec((1, 1, H), lambda l: (l, 0, 0)),            # b2
        pl.BlockSpec((H, H), lambda l: (0, 0)),                  # pooler W (resident)
        pl.BlockSpec((1, H), lambda l: (0, 0)),                  # pooler b
    )
    out_specs = (
        pl.BlockSpec((N, H), lambda l: (0, 0)),                  # encoder output (resident)
        pl.BlockSpec((batch, H), lambda l: (0, 0)),              # pooled output (resident)
    )
    h, pooled = pl.pallas_call(
        functools.partial(_encoder_kernel, batch=batch, seq=seq,
                          num_heads=num_heads, eps=eps),
        out_shape=(jax.ShapeDtypeStruct((N, H), jnp.float32),
                   jax.ShapeDtypeStruct((batch, H), jnp.float32)),
        grid=(L,),                                               # layer axis: sequential carry
        in_specs=in_specs,
        out_specs=out_specs,
        scratch_shapes=[pltpu.VMEM((N, H), jnp.float32),         # residual activation carry
                        pltpu.VMEM((N, H), jnp.float32)],        # per-head context slab
        compiler_params=pltpu.CompilerParams(dimension_semantics=("arbitrary",)),
    )(h0, mask_bias,
      stacked["wqk"], stacked["bqk"], stacked["wo1"], stacked["bo1"],
      stacked["g1"], stacked["b1"], stacked["wi"], stacked["bi"],
      stacked["wo2"], stacked["bo2"], stacked["g2"], stacked["b2"],
      pool_w, pool_b)
    return h, pooled


def _stack_layer_params(layers):
    def stk(name):
        return jnp.stack([lp[name] for lp in layers], axis=0)
    wqk = jnp.stack([jnp.concatenate([lp["wq"], lp["wk"]], axis=1) for lp in layers], axis=0)
    bqk = jnp.stack([jnp.concatenate([lp["bq"], lp["bk"]], axis=1) for lp in layers], axis=0)
    return {"wqk": wqk, "bqk": bqk,
            "wo1": stk("wo1"), "bo1": stk("bo1"), "g1": stk("g1"), "b1": stk("b1"),
            "wi": stk("wi"), "bi": stk("bi"),
            "wo2": stk("wo2"), "bo2": stk("bo2"), "g2": stk("g2"), "b2": stk("b2")}


# ----------------------------------------------------------------------------- full model wrapper

def trans_model_forward(params, input_ids, attention_mask, token_type_ids,
                        *, num_heads, neg_inf, eps):
    B, S = input_ids.shape
    H = params["word_table"].shape[1]
    assert H % num_heads == 0

    # get_extended_mask (encoder path, non-bool mask): keys where (1 - mask) is truthy are
    # filled with neg_inf; precomputed as an additive f32 bias so the kernel does one add.
    mask_bias = ((1 - attention_mask) * neg_inf).astype(jnp.float32)       # (B, S)

    h0 = trans_embedding(input_ids, token_type_ids, params["word_table"],
                         params["pos_table"], params["tok_table"],
                         params["emb_g"], params["emb_b"], eps=eps)        # (B*S, H)

    stacked = _stack_layer_params(params["layers"])
    h, pooled = trans_encoder_pooler(h0, mask_bias, stacked,
                                     params["pool_w"], params["pool_b"],
                                     batch=B, seq=S, num_heads=num_heads, eps=eps)
    return h.reshape(B, S, H), pooled


# ----------------------------------------------------------------------------- pure-JAX reference

def _reference_model(params, input_ids, attention_mask, token_type_ids,
                     *, num_heads, neg_inf, eps):
    hp = lax.Precision.HIGHEST
    B, S = input_ids.shape

    def ln(t, g, b):
        m = t.mean(-1, keepdims=True)
        v = ((t - m) ** 2).mean(-1, keepdims=True)
        return (t - m) / jnp.sqrt(v + eps) * g + b

    word = params["word_table"][input_ids]
    pos = params["pos_table"][jnp.arange(S)][None]
    tok = params["tok_table"][token_type_ids]
    h = ln(word + tok + pos, params["emb_g"], params["emb_b"])

    ext = (1 - attention_mask).astype(bool)                      # True => masked
    H = h.shape[-1]
    hd = H // num_heads

    for p in params["layers"]:
        x2 = h.reshape(B * S, H)
        q = jnp.dot(x2, p["wq"], precision=hp) + p["bq"]
        k = jnp.dot(x2, p["wk"], precision=hp) + p["bk"]
        v = k                                                    # reference quirk: value = key proj

        def split(t):
            return t.reshape(B, S, num_heads, hd).transpose(0, 2, 1, 3)

        qh, kh, vh = split(q), split(k), split(v)
        scores = jnp.einsum("bhqd,bhkd->bhqk", qh, kh, precision=hp) / math.sqrt(hd)
        scores = jnp.where(ext[:, None, None, :], neg_inf, scores)
        probs = jax.nn.softmax(scores, axis=-1)
        ctx = jnp.einsum("bhqk,bhkd->bhqd", probs, vh, precision=hp)
        ctx = ctx.transpose(0, 2, 1, 3).reshape(B * S, H)
        a = ln(jnp.dot(ctx, p["wo1"], precision=hp) + p["bo1"] + x2, p["g1"], p["b1"])
        inter = jax.nn.gelu(jnp.dot(a, p["wi"], precision=hp) + p["bi"], approximate=False)
        o = ln(jnp.dot(inter, p["wo2"], precision=hp) + p["bo2"] + a, p["g2"], p["b2"])
        h = o.reshape(B, S, H)

    pooled = jnp.tanh(jnp.dot(h[:, 0, :], params["pool_w"], precision=hp) + params["pool_b"])
    return h, pooled


# ----------------------------------------------------------------------------- main

if __name__ == "__main__":
    # TransConfig(init_word_embedding=True, vocab_size=32, hidden_size=128, num_layers=2,
    #             num_heads=2, intermediate_size=256, max_position_size=16,
    #             token_type_size=2, layer_norm_eps=1e-10, dropout=0.0, is_decoder=False)
    B, S, H, NH, I, L = 2, 8, 128, 2, 256, 2
    V, P, T = 32, 16, 2
    EPS, NEG_INF = 1e-10, -1e10

    key = jax.random.PRNGKey(0)

    def nrm(k, shape):      # init_weights(): N(0, init_range=0.02) for Linear / Embedding
        return 0.02 * jax.random.normal(k, shape, jnp.float32)

    keys = iter(jax.random.split(key, 64))
    params = {
        "word_table": nrm(next(keys), (V, H)),
        "pos_table": nrm(next(keys), (P, H)),
        "tok_table": nrm(next(keys), (T, H)),
        "emb_g": jnp.ones((1, H), jnp.float32),
        "emb_b": jnp.zeros((1, H), jnp.float32),
        "pool_w": nrm(next(keys), (H, H)),      # stored as (in, out): y = x @ W + b
        "pool_b": jnp.zeros((1, H), jnp.float32),
        "layers": [],
    }
    for _ in range(L):
        params["layers"].append({
            "wq": nrm(next(keys), (H, H)), "bq": jnp.zeros((1, H), jnp.float32),
            "wk": nrm(next(keys), (H, H)), "bk": jnp.zeros((1, H), jnp.float32),
            "wo1": nrm(next(keys), (H, H)), "bo1": jnp.zeros((1, H), jnp.float32),
            "g1": jnp.ones((1, H), jnp.float32), "b1": jnp.zeros((1, H), jnp.float32),
            "wi": nrm(next(keys), (H, I)), "bi": jnp.zeros((1, I), jnp.float32),
            "wo2": nrm(next(keys), (I, H)), "bo2": jnp.zeros((1, H), jnp.float32),
            "g2": jnp.ones((1, H), jnp.float32), "b2": jnp.zeros((1, H), jnp.float32),
        })

    kin = iter(jax.random.split(jax.random.PRNGKey(1), 8))
    input_ids = jax.random.randint(next(kin), (B, S), 0, V, dtype=jnp.int32)
    token_type_ids = jax.random.randint(next(kin), (B, S), 0, T, dtype=jnp.int32)
    # 1 = attend, 0 = ignore (non-bool mask path of get_extended_mask); mask a few keys.
    attention_mask = jnp.ones((B, S), jnp.int32).at[0, -1].set(0).at[1, -2:].set(0)

    enc_out, pooled = trans_model_forward(
        params, input_ids, attention_mask, token_type_ids,
        num_heads=NH, neg_inf=NEG_INF, eps=EPS)
    enc_out, pooled = jax.block_until_ready((enc_out, pooled))

    ref_enc, ref_pool = _reference_model(
        params, input_ids, attention_mask, token_type_ids,
        num_heads=NH, neg_inf=NEG_INF, eps=EPS)

    assert enc_out.shape == (B, S, H) and enc_out.dtype == jnp.float32
    assert pooled.shape == (B, H) and pooled.dtype == jnp.float32
    assert jnp.allclose(enc_out, ref_enc, atol=2e-3, rtol=2e-3), "encoder output mismatch"
    assert jnp.allclose(pooled, ref_pool, atol=2e-3, rtol=2e-3), "pooler output mismatch"

    print("KERNEL_OK")
</pallas_src>

<mosaic_0001>
module attributes {stable_mosaic.version = 11 : i64} {
  func.func @_embedding_kernel(%arg0: i32, %arg1: i32, %arg2: memref<2x8xi32, #tpu.memory_space<smem>>, %arg3: memref<2x8xi32, #tpu.memory_space<smem>>, %arg4: memref<1x1x128xf32, #tpu.memory_space<vmem>>, %arg5: memref<1x1x128xf32, #tpu.memory_space<vmem>>, %arg6: memref<1x1x128xf32, #tpu.memory_space<vmem>>, %arg7: memref<1x128xf32, #tpu.memory_space<vmem>>, %arg8: memref<1x128xf32, #tpu.memory_space<vmem>>, %arg9: memref<1x1x1x128xf32, #tpu.memory_space<vmem>>) attributes {dimension_semantics = [#tpu.dimension_semantics<parallel>, #tpu.dimension_semantics<parallel>], iteration_bounds = array<i64: 2, 8>, scalar_prefetch = 2 : i64, scratch_operands = 0 : i64, tpu.core_type = #tpu.core_type<tc>, window_params = [{transform_indices = @transform_0, window_bounds = array<i64: 1, 1, 128>}, {transform_indices = @transform_1, window_bounds = array<i64: 1, 1, 128>}, {transform_indices = @transform_2, window_bounds = array<i64: 1, 1, 128>}, {pipeline_mode = #tpu.pipeline_mode<synchronous>, transform_indices = @transform_3, window_bounds = array<i64: 1, 128>}, {pipeline_mode = #tpu.pipeline_mode<synchronous>, transform_indices = @transform_4, window_bounds = array<i64: 1, 128>}, {transform_indices = @transform_5, window_bounds = array<i64: 1, 1, 1, 128>}]} {
    %c0 = arith.constant 0 : index
    %c0_0 = arith.constant 0 : index
    %c0_1 = arith.constant 0 : index
    %0 = vector.load %arg4[%c0, %c0_0, %c0_1] : memref<1x1x128xf32, #tpu.memory_space<vmem>>, vector<1x1x128xf32>
    %1 = vector.shape_cast %0 : vector<1x1x128xf32> to vector<1x128xf32>
    %c0_2 = arith.constant 0 : index
    %c0_3 = arith.constant 0 : index
    %c0_4 = arith.constant 0 : index
    %2 = vector.load %arg5[%c0_2, %c0_3, %c0_4] : memref<1x1x128xf32, #tpu.memory_space<vmem>>, vector<1x1x128xf32>
    %3 = vector.shape_cast %2 : vector<1x1x128xf32> to vector<1x128xf32>
    %4 = arith.addf %1, %3 : vector<1x128xf32>
    %c0_5 = arith.constant 0 : index
    %c0_6 = arith.constant 0 : index
    %c0_7 = arith.constant 0 : index
    %5 = vector.load %arg6[%c0_5, %c0_6, %c0_7] : memref<1x1x128xf32, #tpu.memory_space<vmem>>, vector<1x1x128xf32>
    %6 = vector.shape_cast %5 : vector<1x1x128xf32> to vector<1x128xf32>
    %7 = arith.addf %4, %6 : vector<1x128xf32>
    %c0_8 = arith.constant 0 : index
    %c0_9 = arith.constant 0 : index
    %8 = vector.load %arg7[%c0_8, %c0_9] : memref<1x128xf32, #tpu.memory_space<vmem>>, vector<1x128xf32>
    %c0_10 = arith.constant 0 : index
    %c0_11 = arith.constant 0 : index
    %9 = vector.load %arg8[%c0_10, %c0_11] : memref<1x128xf32, #tpu.memory_space<vmem>>, vector<1x128xf32>
    %cst = arith.constant dense<0.000000e+00> : vector<1xf32>
    %10 = vector.multi_reduction <add>, %7, %cst [1] : vector<1x128xf32> to vector<1xf32>
    %11 = vector.shape_cast %10 : vector<1xf32> to vector<1x1xf32>
    %cst_12 = arith.constant 1.280000e+02 : f32
    %12 = vector.broadcast %cst_12 : f32 to vector<1x1xf32>
    %13 = arith.divf %11, %12 : vector<1x1xf32>
    %14 = vector.broadcast %13 : vector<1x1xf32> to vector<1x128xf32>
    %15 = arith.subf %7, %14 : vector<1x128xf32>
    %16 = arith.mulf %15, %15 : vector<1x128xf32>
    %cst_13 = arith.constant dense<0.000000e+00> : vector<1xf32>
    %17 = vector.multi_reduction <add>, %16, %cst_13 [1] : vector<1x128xf32> to vector<1xf32>
    %18 = vector.shape_cast %17 : vector<1xf32> to vector<1x1xf32>
    %cst_14 = arith.constant 1.280000e+02 : f32
    %19 = vector.broadcast %cst_14 : f32 to vector<1x1xf32>
    %20 = arith.divf %18, %19 : vector<1x1xf32>
    %21 = vector.broadcast %13 : vector<1x1xf32> to vector<1x128xf32>
    %22 = arith.subf %7, %21 : vector<1x128xf32>
    %cst_15 = arith.constant 1.000000e-10 : f32
    %23 = vector.broadcast %cst_15 : f32 to vector<1x1xf32>
    %24 = arith.addf %20, %23 : vector<1x1xf32>
    %25 = math.rsqrt %24 : vector<1x1xf32>
    %26 = vector.broadcast %25 : vector<1x1xf32> to vector<1x128xf32>
    %27 = arith.mulf %22, %26 : vector<1x128xf32>
    %28 = arith.mulf %27, %8 : vector<1x128xf32>
    %29 = arith.addf %28, %9 : vector<1x128xf32>
    %30 = vector.shape_cast %29 : vector<1x128xf32> to vector<1x1x1x128xf32>
    %c0_16 = arith.constant 0 : index
    %c0_17 = arith.constant 0 : index
    %c0_18 = arith.constant 0 : index
    %c0_19 = arith.constant 0 : index
    %31 = vector.load %arg9[%c0_16, %c0_17, %c0_18, %c0_19] : memref<1x1x1x128xf32, #tpu.memory_space<vmem>>, vector<1x1x1x128xf32>
    tpu.vector_store %arg9[%c0_16, %c0_17, %c0_18, %c0_19], %30 {strides = array<i32>} : memref<1x1x1x128xf32, #tpu.memory_space<vmem>>, vector<1x1x1x128xf32>,
    return
  }
  func.func @transform_0(%arg0: i32, %arg1: i32, %arg2: memref<2x8xi32, #tpu.memory_space<smem>>, %arg3: memref<2x8xi32, #tpu.memory_space<smem>>) -> (i32, i32, i32) {
    %0 = arith.index_cast %arg0 : i32 to index
    %1 = arith.index_cast %arg1 : i32 to index
    %2 = memref.load %arg2[%0, %1] : memref<2x8xi32, #tpu.memory_space<smem>>
    %c0_i32 = arith.constant 0 : i32
    %c0_i32_0 = arith.constant 0 : i32
    %c0_i32_1 = arith.constant 0 : i32
    return %2, %c0_i32, %c0_i32_0 : i32, i32, i32
  }
  func.func @transform_1(%arg0: i32, %arg1: i32, %arg2: memref<2x8xi32, #tpu.memory_space<smem>>, %arg3: memref<2x8xi32, #tpu.memory_space<smem>>) -> (i32, i32, i32) {
    %0 = arith.index_cast %arg0 : i32 to index
    %1 = arith.index_cast %arg1 : i32 to index
    %2 = memref.load %arg3[%0, %1] : memref<2x8xi32, #tpu.memory_space<smem>>
    %c0_i32 = arith.constant 0 : i32
    %c0_i32_0 = arith.constant 0 : i32
    %c0_i32_1 = arith.constant 0 : i32
    return %2, %c0_i32, %c0_i32_0 : i32, i32, i32
  }
  func.func @transform_2(%arg0: i32, %arg1: i32, %arg2: memref<2x8xi32, #tpu.memory_space<smem>>, %arg3: memref<2x8xi32, #tpu.memory_space<smem>>) -> (i32, i32, i32) {
    %c0_i32 = arith.constant 0 : i32
    %c0_i32_0 = arith.constant 0 : i32
    %c0_i32_1 = arith.constant 0 : i32
    return %arg1, %c0_i32, %c0_i32_0 : i32, i32, i32
  }
  func.func @transform_3(%arg0: i32, %arg1: i32, %arg2: memref<2x8xi32, #tpu.memory_space<smem>>, %arg3: memref<2x8xi32, #tpu.memory_space<smem>>) -> (i32, i32) {
    %c0_i32 = arith.constant 0 : i32
    %c0_i32_0 = arith.constant 0 : i32
    %c0_i32_1 = arith.constant 0 : i32
    return %c0_i32, %c0_i32_0 : i32, i32
  }
  func.func @transform_4(%arg0: i32, %arg1: i32, %arg2: memref<2x8xi32, #tpu.memory_space<smem>>, %arg3: memref<2x8xi32, #tpu.memory_space<smem>>) -> (i32, i32) {
    %c0_i32 = arith.constant 0 : i32
    %c0_i32_0 = arith.constant 0 : i32
    %c0_i32_1 = arith.constant 0 : i32
    return %c0_i32, %c0_i32_0 : i32, i32
  }
  func.func @transform_5(%arg0: i32, %arg1: i32, %arg2: memref<2x8xi32, #tpu.memory_space<smem>>, %arg3: memref<2x8xi32, #tpu.memory_space<smem>>) -> (i32, i32, i32, i32) {
    %c0_i32 = arith.constant 0 : i32
    %c0_i32_0 = arith.constant 0 : i32
    %c0_i32_1 = arith.constant 0 : i32
    return %arg0, %arg1, %c0_i32, %c0_i32_0 : i32, i32, i32, i32
  }
}

</mosaic_0001>

<llo_original>
// kernel: tpu_custom_call.1
$region0: #{tpu_custom_call.1}
  #allocation0 [shape = 'u32[]', space=smem, size = 0x4, offset = 0x4, fixed_abs, tag = 'smem constant byte address 0x4 - core index']
  #allocation1 [shape = 'u32[72,128]{1,0:T(1,128)}', space=vmem, size = 0x9000, scoped, tag = 'internal scratch']
  #allocation2 [shape = 's32[1]{0}', space=sflag, size = 0x4, scoped, tag = 'scoped memory for tpu_custom_call.1']
  #allocation3 [shape = 'u8[1024]{0}', space=smem, size = 0x400, scoped, tag = 'prefetched SMEM operand 0']
  #allocation4 [shape = 'u8[1024]{0}', space=smem, size = 0x400, scoped, tag = 'prefetched SMEM operand 1']
  %s0 = inlined_call_operand.hbm [shape: s32[2,8], index: 0, kind: input, shape index: {}]
  %s1 = inlined_call_operand.hbm [shape: s32[2,8], index: 1, kind: input, shape index: {}]
  %s2 = inlined_call_operand.hbm [shape: f32[32,1,128], index: 2, kind: input, shape index: {}]
  %s3 = inlined_call_operand.vmem [shape: f32[2,1,128], index: 3, kind: input, shape index: {}]
  %s4 = inlined_call_operand.hbm [shape: f32[16,1,128], index: 4, kind: input, shape index: {}]
  %s5 = inlined_call_operand.vmem [shape: f32[1,128], index: 5, kind: input, shape index: {}]
  %s6 = inlined_call_operand.vmem [shape: f32[1,128], index: 6, kind: input, shape index: {}]
  %s7 = inlined_call_operand.hbm [shape: f32[2,8,1,128], index: 7, kind: output, shape index: {}]
  %s8 = sld [smem:[#allocation0]]
  $region61: #{tpu_custom_call.1} parent=0
    _
  %s10 = ssub.s32 1, %s8
  %s11 = scalar_select 0, %s10, %s8
  %s13 = sshll.u32 %s0, 4
  %s14 = int_to_ptr.hbm [resolvable:$true] %s13
  %16 = dma.hbm_to_smem %s14, 32, [#allocation3], [#allocation2]
  %s18 = sshll.u32 %s1, 4
  %s19 = int_to_ptr.hbm [resolvable:$true] %s18
  %21 = dma.hbm_to_smem %s19, 32, [#allocation4], [#allocation2]
  %23 = dma.done [#allocation2], 64
  %24 = sfence
  $region1: #{tpu_custom_call.1} parent=0
    #allocation5 [shape = 'u8[1024]{0}', space=vmem, size = 0x400, scoped, tag = 'input window, operand 2']
    #allocation6 [shape = 's32[2]{0}', space=sflag, size = 0x8, scoped, tag = 'scoped memory for tpu_custom_call.1']
    #allocation7 [shape = 's32[2]{0}', space=sflag, size = 0x8, scoped, tag = 'scoped memory for tpu_custom_call.1']
    #allocation8 [shape = 'u8[1024]{0}', space=vmem, size = 0x400, scoped, tag = 'input window, operand 4']
    #allocation9 [shape = 's32[2]{0}', space=sflag, size = 0x8, scoped, tag = 'scoped memory for tpu_custom_call.1']
    #allocation10 [shape = 'u8[1024]{0}', space=vmem, size = 0x400, scoped, tag = 'output window, operand 0']
    %25 = vsyncpa [#allocation6], 0
    %s26 = scalar_lea.sflag [#allocation6], 1
    %27 = vsyncpa %s26, 0
    %28 = vsyncpa [#allocation9], 0
    %s29 = scalar_lea.sflag [#allocation9], 1
    %30 = vsyncpa %s29, 0
    %31 = vsyncpa [#allocation7], 0
    %s32 = scalar_lea.sflag [#allocation7], 1
    %33 = vsyncpa %s32, 0
    loop: start=0, step=1, limit=18
    $region2: #{tpu_custom_call.1} parent=1 // loop_pre_header
      _
    $region3: #{tpu_custom_call.1} parent=1 // loop_header
      %s35 = sphi 0, %s39
      %p36 = scmp.ge.s32.totalorder %s35, 18
      %s42 = sphi 0, %s54
      %s43 = sphi 0, %s50
      %s44 = sphi 0, %s42
      %s45 = sphi 0, %s43
      %s46 = sphi 0, %s44
      %s47 = sphi 0, %s45
      %s73 = sphi 0, %s75
      %s76 = sphi 0, %s73
      %s77 = sphi 0, %s76
      %s93 = sphi 0, %s77
      %s115 = sphi 0, %s117
      %s118 = sphi 0, %s115
      %s119 = sphi 0, %s118
      %s135 = sphi 0, %s119
      %s141 = sphi 0, %s143
      %s144 = sphi 0, %s141
      %s145 = sphi 0, %s144
      %s161 = sphi 0, %s145
      %s165 = sphi 0, %s165
      %s167 = sphi 0, %s165
      %s168 = sphi 0, %s167
      %s182 = sphi 0, %s168
      %s186 = sphi 0, %s186
      %s188 = sphi 0, %s186
      %s189 = sphi 0, %s188
      %s203 = sphi 0, %s189
      %s211 = sphi 0, %s213
      %s214 = sphi 0, %s211
      %s215 = sphi 0, %s214
      %s231 = sphi 0, %s215
    $region4: #{tpu_custom_call.1} parent=1 // loop_header_branch
      %38 = sbr.rel (%p36) target = $region8
    $region5: #{tpu_custom_call.1} parent=1 // loop_body
      %s40 = ssub.s32 %s35, 1
      %s41 = ssub.s32 %s35, 2
      %s48 = sadd.s32 1, %s43
      %p49 = scmp.ge.s32.totalorder %s48, 8
      %s50 = scalar_select %p49, 0, %s48
      %s51 = sadd.s32 1, %s42
      %s52 = scalar_select %p49, %s51, %s42
      %p53 = scmp.ge.s32.totalorder %s52, 2
      %s54 = scalar_select %p53, 0, %s52
      %s55 = sshra.s32 %s43, 7
      %s56 = sand.u32 %s43, 127
      %s57 = sadd.s32 %s55, %s42
      %s58 = smul.u32 %s57, 128
      %s59 = sshra.s32 %s43, 7
      %s60 = sand.u32 %s43, 127
      %s61 = sadd.s32 %s58, %s60
      %s62 = sld [smem:[#allocation3 + %s61]]
      %s63 = sshra.s32 %s50, 7
      %s64 = sand.u32 %s50, 127
      %s65 = sadd.s32 %s63, %s54
      %s66 = smul.u32 %s65, 128
      %s67 = sshra.s32 %s50, 7
      %s68 = sand.u32 %s50, 127
      %s69 = sadd.s32 %s66, %s68
      %s70 = sld [smem:[#allocation3 + %s69]]
      %s71 = ssub.s32 %s62, %s70
      %p72 = scmp.eq.s32.totalorder %s71, 0
      %s74 = sadd.s32 %s73, 1
      %s75 = scalar_select %p72, %s73, %s74
      %p78 = pneg %p72
      %p79 = scmp.eq.s32.totalorder %s35, 15
      %p80 = por %p78, %p79
      %p81 = scmp.ne.s32.totalorder %s73, %s76
      %p82 = scmp.eq.s32.totalorder %s35, 0
      %p83 = por %p81, %p82
      %p84 = scmp.ne.s32.totalorder %s73, %s76
      %p85 = scmp.eq.s32.totalorder %s40, 15
      %p86 = por %p84, %p85
      %p87 = scmp.ne.s32.totalorder %s76, %s77
      %p88 = scmp.eq.s32.totalorder %s40, 0
      %p89 = por %p87, %p88
      %p90 = scmp.ne.s32.totalorder %s76, %s77
      %p91 = scmp.eq.s32.totalorder %s41, 15
      %p92 = por %p90, %p91
      %p94 = scmp.ne.s32.totalorder %s77, %s93
      %p95 = scmp.eq.s32.totalorder %s41, 0
      %p96 = por %p94, %p95
      %s97 = sshra.s32 %s43, 7
      %s98 = sand.u32 %s43, 127
      %s99 = sadd.s32 %s97, %s42
      %s100 = smul.u32 %s99, 128
      %s101 = sshra.s32 %s43, 7
      %s102 = sand.u32 %s43, 127
      %s103 = sadd.s32 %s100, %s102
      %s104 = sld [smem:[#allocation4 + %s103]]
      %s105 = sshra.s32 %s50, 7
      %s106 = sand.u32 %s50, 127
      %s107 = sadd.s32 %s105, %s54
      %s108 = smul.u32 %s107, 128
      %s109 = sshra.s32 %s50, 7
      %s110 = sand.u32 %s50, 127
      %s111 = sadd.s32 %s108, %s110
      %s112 = sld [smem:[#allocation4 + %s111]]
      %s113 = ssub.s32 %s104, %s112
      %p114 = scmp.eq.s32.totalorder %s113, 0
      %s116 = sadd.s32 %s115, 1
      %s117 = scalar_select %p114, %s115, %s116
      %p120 = pneg %p114
      %p121 = scmp.eq.s32.totalorder %s35, 15
      %p122 = por %p120, %p121
      %p123 = scmp.ne.s32.totalorder %s115, %s118
      %p124 = scmp.eq.s32.totalorder %s35, 0
      %p125 = por %p123, %p124
      %p126 = scmp.ne.s32.totalorder %s115, %s118
      %p127 = scmp.eq.s32.totalorder %s40, 15
      %p128 = por %p126, %p127
      %p129 = scmp.ne.s32.totalorder %s118, %s119
      %p130 = scmp.eq.s32.totalorder %s40, 0
      %p131 = por %p129, %p130
      %p132 = scmp.ne.s32.totalorder %s118, %s119
      %p133 = scmp.eq.s32.totalorder %s41, 15
      %p134 = por %p132, %p133
      %p136 = scmp.ne.s32.totalorder %s119, %s135
      %p137 = scmp.eq.s32.totalorder %s41, 0
      %p138 = por %p136, %p137
      %s139 = ssub.s32 %s43, %s50
      %p140 = scmp.eq.s32.totalorder %s139, 0
      %s142 = sadd.s32 %s141, 1
      %s143 = scalar_select %p140, %s141, %s142
      %p146 = pneg %p140
      %p147 = scmp.eq.s32.totalorder %s35, 15
      %p148 = por %p146, %p147
      %p149 = scmp.ne.s32.totalorder %s141, %s144
      %p150 = scmp.eq.s32.totalorder %s35, 0
      %p151 = por %p149, %p150
      %p152 = scmp.ne.s32.totalorder %s141, %s144
      %p153 = scmp.eq.s32.totalorder %s40, 15
      %p154 = por %p152, %p153
      %p155 = scmp.ne.s32.totalorder %s144, %s145
      %p156 = scmp.eq.s32.totalorder %s40, 0
      %p157 = por %p155, %p156
      %p158 = scmp.ne.s32.totalorder %s144, %s145
      %p159 = scmp.eq.s32.totalorder %s41, 15
      %p160 = por %p158, %p159
      %p162 = scmp.ne.s32.totalorder %s145, %s161
      %p163 = scmp.eq.s32.totalorder %s41, 0
      %p164 = por %p162, %p163
      %s166 = sadd.s32 %s165, 1
      %p169 = scmp.eq.s32.totalorder %s35, 15
      %p170 = scmp.ne.s32.totalorder %s165, %s167
      %p171 = scmp.eq.s32.totalorder %s35, 0
      %p172 = por %p170, %p171
      %p173 = scmp.ne.s32.totalorder %s165, %s167
      %p174 = scmp.eq.s32.totalorder %s40, 15
      %p175 = por %p173, %p174
      %p176 = scmp.ne.s32.totalorder %s167, %s168
      %p177 = scmp.eq.s32.totalorder %s40, 0
      %p178 = por %p176, %p177
      %p179 = scmp.ne.s32.totalorder %s167, %s168
      %p180 = scmp.eq.s32.totalorder %s41, 15
      %p181 = por %p179, %p180
      %p183 = scmp.ne.s32.totalorder %s168, %s182
      %p184 = scmp.eq.s32.totalorder %s41, 0
      %p185 = por %p183, %p184
      %s187 = sadd.s32 %s186, 1
      %p190 = scmp.eq.s32.totalorder %s35, 15
      %p191 = scmp.ne.s32.totalorder %s186, %s188
      %p192 = scmp.eq.s32.totalorder %s35, 0
      %p193 = por %p191, %p192
      %p194 = scmp.ne.s32.totalorder %s186, %s188
      %p195 = scmp.eq.s32.totalorder %s40, 15
      %p196 = por %p194, %p195
      %p197 = scmp.ne.s32.totalorder %s188, %s189
      %p198 = scmp.eq.s32.totalorder %s40, 0
      %p199 = por %p197, %p198
      %p200 = scmp.ne.s32.totalorder %s188, %s189
      %p201 = scmp.eq.s32.totalorder %s41, 15
      %p202 = por %p200, %p201
      %p204 = scmp.ne.s32.totalorder %s189, %s203
      %p205 = scmp.eq.s32.totalorder %s41, 0
      %p206 = por %p204, %p205
      %s207 = ssub.s32 %s42, %s54
      %s208 = ssub.s32 %s43, %s50
      %s209 = sor.u32 %s207, %s208
      %p210 = scmp.eq.s32.totalorder %s209, 0
      %s212 = sadd.s32 %s211, 1
      %s213 = scalar_select %p210, %s211, %s212
      %p216 = pneg %p210
      %p217 = scmp.eq.s32.totalorder %s35, 15
      %p218 = por %p216, %p217
      %p219 = scmp.ne.s32.totalorder %s211, %s214
      %p220 = scmp.eq.s32.totalorder %s35, 0
      %p221 = por %p219, %p220
      %p222 = scmp.ne.s32.totalorder %s211, %s214
      %p223 = scmp.eq.s32.totalorder %s40, 15
      %p224 = por %p222, %p223
      %p225 = scmp.ne.s32.totalorder %s214, %s215
      %p226 = scmp.eq.s32.totalorder %s40, 0
      %p227 = por %p225, %p226
      %p228 = scmp.ne.s32.totalorder %s214, %s215
      %p229 = scmp.eq.s32.totalorder %s41, 15
      %p230 = por %p228, %p229
      %p232 = scmp.ne.s32.totalorder %s215, %s231
      %p233 = scmp.eq.s32.totalorder %s41, 0
      %p234 = por %p232, %p233
      %p235 = scmp.le.s32.totalorder 1, %s35
      %p236 = scmp.lt.s32.totalorder %s35, 17
      %p237 = pnand %p235, %p236
      %p238 = pneg %p237
      // Predicated region
      $region9: #{tpu_custom_call.1} parent=5 // pred_check
        _
      $region10: #{tpu_custom_call.1} parent=5 // pred_check_branch
        %240 = sbr.rel (%p237) target = $region12
      $region11: #{tpu_custom_call.1} parent=5 // pred_region
        %s241 = ssub.s32 %s35, 1
        // Predicated region
        $region13: #{tpu_custom_call.1} parent=11 // pred_check
          %p242 = pneg %p178
        $region14: #{tpu_custom_call.1} parent=11 // pred_check_branch
          %244 = sbr.rel (%p242) target = $region16
        $region15: #{tpu_custom_call.1} parent=11 // pred_region
          _
        $region16: #{tpu_custom_call.1} parent=11 // pred_fallthru
          _
        // Predicated region
        $region17: #{tpu_custom_call.1} parent=11 // pred_check
          %p245 = pneg %p199
        $region18: #{tpu_custom_call.1} parent=11 // pred_check_branch
          %247 = sbr.rel (%p245) target = $region20
        $region19: #{tpu_custom_call.1} parent=11 // pred_region
          _
        $region20: #{tpu_custom_call.1} parent=11 // pred_fallthru
          _
      $region12: #{tpu_custom_call.1} parent=5 // pred_fallthru
        _
      %p248 = scmp.lt.s32.totalorder %s35, 16
      // Predicated region
      $region21: #{tpu_custom_call.1} parent=5 // pred_check
        %p249 = pneg %p248
      $region22: #{tpu_custom_call.1} parent=5 // pred_check_branch
        %251 = sbr.rel (%p249) target = $region24
      $region23: #{tpu_custom_call.1} parent=5 // pred_region
        // Predicated region
        $region25: #{tpu_custom_call.1} parent=23 // pred_check
          %p252 = pneg %p83
        $region26: #{tpu_custom_call.1} parent=23 // pred_check_branch
          %254 = sbr.rel (%p252) target = $region28
        $region27: #{tpu_custom_call.1} parent=23 // pred_region
          %s255 = sand.u32 %s73, 1
          %s256 = scalar_lea.sflag [#allocation6], %s255
          %s257 = sand.u32 %s73, 1
          %s258 = scalar_lea.vmem [#allocation5], %s257
          %s259 = sshra.s32 %s43, 7
          %s260 = sand.u32 %s43, 127
          %s261 = sadd.s32 %s259, %s42
          %s262 = smul.u32 %s261, 128
          %s263 = sshra.s32 %s43, 7
          %s264 = sand.u32 %s43, 127
          %s265 = sadd.s32 %s262, %s264
          %s266 = sld [smem:[#allocation3 + %s265]]
          %268 = vsyncadd %s256, 0
          %s269 = scalar_lea.hbm %s2, %s266
          %s271 = sshll.u32 %s269, 4
          %s272 = int_to_ptr.hbm [resolvable:$true] %s271
          %s273 = sshll.u32 %s258, 4
          %s274 = int_to_ptr.vmem [resolvable:$true] %s273
          %276 = dma.hbm_to_vmem [thread:$0]  %s272, 16, %s274, %s256
        $region28: #{tpu_custom_call.1} parent=23 // pred_fallthru
          _
        // Predicated region
        $region29: #{tpu_custom_call.1} parent=23 // pred_check
          %p277 = pneg %p125
        $region30: #{tpu_custom_call.1} parent=23 // pred_check_branch
          %279 = sbr.rel (%p277) target = $region32
        $region31: #{tpu_custom_call.1} parent=23 // pred_region
          %s280 = sshra.s32 %s43, 7
          %s281 = sand.u32 %s43, 127
          %s282 = sadd.s32 %s280, %s42
          %s283 = smul.u32 %s282, 128
          %s284 = sshra.s32 %s43, 7
          %s285 = sand.u32 %s43, 127
          %s286 = sadd.s32 %s283, %s285
          %s287 = sld [smem:[#allocation4 + %s286]]
          %p288 = scmp.lt.s32.totalorder %s287, 1
          %s289 = scalar_select %p288, %s287, 1
          %s290 = scalar_lea.vmem %s3, %s289
          %s291 = sshra.s32 %s43, 7
          %s292 = sand.u32 %s43, 127
          %s293 = sadd.s32 %s291, %s42
          %s294 = smul.u32 %s293, 128
          %s295 = sshra.s32 %s43, 7
          %s296 = sand.u32 %s43, 127
          %s297 = sadd.s32 %s294, %s296
          %s298 = sld [smem:[#allocation4 + %s297]]
        $region32: #{tpu_custom_call.1} parent=23 // pred_fallthru
          _
        // Predicated region
        $region33: #{tpu_custom_call.1} parent=23 // pred_check
          %p299 = pneg %p151
        $region34: #{tpu_custom_call.1} parent=23 // pred_check_branch
          %301 = sbr.rel (%p299) target = $region36
        $region35: #{tpu_custom_call.1} parent=23 // pred_region
          %s302 = sand.u32 %s141, 1
          %s303 = scalar_lea.sflag [#allocation9], %s302
          %s304 = sand.u32 %s141, 1
          %s305 = scalar_lea.vmem [#allocation8], %s304
          %307 = vsyncadd %s303, 0
          %s308 = scalar_lea.hbm %s4, %s43
          %s310 = sshll.u32 %s308, 4
          %s311 = int_to_ptr.hbm [resolvable:$true] %s310
          %s312 = sshll.u32 %s305, 4
          %s313 = int_to_ptr.vmem [resolvable:$true] %s312
          %315 = dma.hbm_to_vmem [thread:$0]  %s311, 16, %s313, %s303
        $region36: #{tpu_custom_call.1} parent=23 // pred_fallthru
          _
      $region24: #{tpu_custom_call.1} parent=5 // pred_fallthru
        _
      %p316 = scmp.le.s32.totalorder 1, %s35
      %p317 = scmp.lt.s32.totalorder %s35, 17
      %p318 = pnand %p316, %p317
      %p319 = pneg %p318
      // Predicated region
      $region37: #{tpu_custom_call.1} parent=5 // pred_check
        _
      $region38: #{tpu_custom_call.1} parent=5 // pred_check_branch
        %321 = sbr.rel (%p318) target = $region40
      $region39: #{tpu_custom_call.1} parent=5 // pred_region
        %s322 = ssub.s32 %s35, 1
        %s323 = sand.u32 %s76, 1
        %s324 = scalar_lea.sflag [#allocation6], %s323
        %s325 = sand.u32 %s76, 1
        %s326 = scalar_lea.vmem [#allocation5], %s325
        // Predicated region
        $region41: #{tpu_custom_call.1} parent=39 // pred_check
          %p327 = pneg %p89
        $region42: #{tpu_custom_call.1} parent=39 // pred_check_branch
          %329 = sbr.rel (%p327) target = $region44
        $region43: #{tpu_custom_call.1} parent=39 // pred_region
          %331 = dma.done %s324, 16
        $region44: #{tpu_custom_call.1} parent=39 // pred_fallthru
          _
        %s332 = sand.u32 %s144, 1
        %s333 = scalar_lea.sflag [#allocation9], %s332
        %s334 = sand.u32 %s144, 1
        %s335 = scalar_lea.vmem [#allocation8], %s334
        // Predicated region
        $region45: #{tpu_custom_call.1} parent=39 // pred_check
          %p336 = pneg %p157
        $region46: #{tpu_custom_call.1} parent=39 // pred_check_branch
          %338 = sbr.rel (%p336) target = $region48
        $region47: #{tpu_custom_call.1} parent=39 // pred_region
          %340 = dma.done %s333, 16
        $region48: #{tpu_custom_call.1} parent=39 // pred_fallthru
          _
        %s341 = sand.u32 %s76, 1
        %s342 = scalar_lea.sflag [#allocation6], %s341
        %s343 = sand.u32 %s76, 1
        %s344 = scalar_lea.vmem [#allocation5], %s343
        %p345 = pneg %p89
        %p346 = pneg %p86
        %s347 = sshra.s32 %s45, 7
        %s348 = sand.u32 %s45, 127
        %s349 = sadd.s32 %s347, %s44
        %s350 = smul.u32 %s349, 128
        %s351 = sshra.s32 %s45, 7
        %s352 = sand.u32 %s45, 127
        %s353 = sadd.s32 %s350, %s352
        %s354 = sld [smem:[#allocation4 + %s353]]
        %p355 = scmp.lt.s32.totalorder %s354, 1
        %s356 = scalar_select %p355, %s354, 1
        %s357 = scalar_lea.vmem %s3, %s356
        %p358 = pneg %p131
        %p359 = pneg %p128
        %s360 = sand.u32 %s144, 1
        %s361 = scalar_lea.sflag [#allocation9], %s360
        %s362 = sand.u32 %s144, 1
        %s363 = scalar_lea.vmem [#allocation8], %s362
        %p364 = pneg %p157
        %p365 = pneg %p154
        %p366 = pneg %p178
        %p367 = pneg %p175
        %p368 = pneg %p199
        %p369 = pneg %p196
        %p370 = pneg %p227
        %p371 = pneg %p224
        %s372 = sand.u32 %s214, 1
        %s373 = scalar_lea.sflag [#allocation7], %s372
        %s374 = sand.u32 %s214, 1
        %s375 = scalar_lea.vmem [#allocation10], %s374
        %s376 = sshra.s32 %s45, 7
        %s377 = sand.u32 %s45, 127
        %s378 = sadd.s32 %s376, %s44
        %s379 = smul.u32 %s378, 128
        %s380 = sshra.s32 %s45, 7
        %s381 = sand.u32 %s45, 127
        %s382 = sadd.s32 %s379, %s381
        %s383 = sld [smem:[#allocation3 + %s382]]
        %s384 = sshra.s32 %s45, 7
        %s385 = sand.u32 %s45, 127
        %s386 = sadd.s32 %s384, %s44
        %s387 = smul.u32 %s386, 128
        %s388 = sshra.s32 %s45, 7
        %s389 = sand.u32 %s45, 127
        %s390 = sadd.s32 %s387, %s389
        %s391 = sld [smem:[#allocation4 + %s390]]
        %p392 = scmp.lt.s32.totalorder %s391, 1
        %s393 = scalar_select %p392, %s391, 1
        %s394 = scalar_lea.vmem %s3, %s393
        %s395 = sshra.s32 %s45, 7
        %s396 = sand.u32 %s45, 127
        %s397 = sadd.s32 %s395, %s44
        %s398 = smul.u32 %s397, 128
        %s399 = sshra.s32 %s45, 7
        %s400 = sand.u32 %s45, 127
        %s401 = sadd.s32 %s398, %s400
        %s402 = sld [smem:[#allocation4 + %s401]]
        %v403 = vld [vmem:[%s326] sm:$0x1]
        %v404 = vld [vmem:[%s394] sm:$0x1]
        %v405 = vadd.f32 %v403, %v404
        %v406 = vld [vmem:[%s335] sm:$0x1]
        %v407 = vadd.f32 %v405, %v406
        %v408 = vld [vmem:[%s5] sm:$0x1]
        %v409 = vld [vmem:[%s6] sm:$0x1]
        %vm410 = vcmask 1040384
        %v411 = vsel %vm410, %v407, 0.0
        %412 = vadd.xlane.f32.xlu0 %v411
        %v413 = vpop.xlane.xlu0 %412
        %v414 = vrcp.pop 128.0
        %v415 = vmul.f32 128.0, %v414
        %v416 = vsub.f32 1.0, %v415
        %v417 = vmul.f32 %v414, %v416
        %v418 = vadd.f32 %v414, %v417
        %vm419 = vweird.f32 %v414
        %v420 = vsel %vm419, %v414, %v418
        %v421 = vmul.f32 %v413, %v420
        %v422 = vsub.f32 %v407, %v421
        %v423 = vmul.f32 %v422, %v422
        %v424 = vsel %vm410, %v423, 0.0
        %425 = vadd.xlane.f32.xlu0 %v424
        %v426 = vpop.xlane.xlu0 %425
        %v427 = vmul.f32 %v426, %v420
        %v428 = vadd.f32 %v427, 1e-10
        %v429 = vrsqrt.pop %v428
        %v430 = vmul.f32 %v429, %v428
        %v431 = vmul.f32 %v430, %v429
        %v432 = vmul.f32 0.5, %v431
        %v433 = vsub.f32 1.5, %v432
        %v434 = vmul.f32 %v429, %v433
        %vm435 = vweird.f32 %v428
        %vm436 = vweird.f32 %v429
        %vm437 = vmor %vm435, %vm436
        %v438 = vsel %vm437, %v429, %v434
        %v439 = vmul.f32 %v422, %v438
        %v440 = vmul.f32 %v439, %v408
        %v441 = vadd.f32 %v440, %v409
        %442 = vst [vmem:[%s375] sm:$0x1] %v441
        %s443 = sand.u32 %s214, 1
        %s444 = scalar_lea.sflag [#allocation7], %s443
        %s445 = sand.u32 %s214, 1
        %s446 = scalar_lea.vmem [#allocation10], %s445
        // Predicated region
        $region49: #{tpu_custom_call.1} parent=39 // pred_check
          %p447 = pneg %p224
        $region50: #{tpu_custom_call.1} parent=39 // pred_check_branch
          %449 = sbr.rel (%p447) target = $region52
        $region51: #{tpu_custom_call.1} parent=39 // pred_region
          %451 = vsyncadd %s444, 0
          %s452 = smul.addr %s44, 8
          %s453 = sadd.s32 %s45, %s452
          %s454 = scalar_lea.hbm %s7, %s453
          %s456 = sshll.u32 %s446, 4
          %s457 = int_to_ptr.vmem [resolvable:$true] %s456
          %s458 = sshll.u32 %s454, 4
          %s459 = int_to_ptr.hbm [resolvable:$true] %s458
          %461 = dma.vmem_to_hbm [thread:$0]  %s457, 16, %s459, %s444
        $region52: #{tpu_custom_call.1} parent=39 // pred_fallthru
          _
      $region40: #{tpu_custom_call.1} parent=5 // pred_fallthru
        _
      %p462 = scmp.le.s32.totalorder 2, %s35
      // Predicated region
      $region53: #{tpu_custom_call.1} parent=5 // pred_check
        %p463 = pneg %p462
      $region54: #{tpu_custom_call.1} parent=5 // pred_check_branch
        %465 = sbr.rel (%p463) target = $region56
      $region55: #{tpu_custom_call.1} parent=5 // pred_region
        %s466 = ssub.s32 %s35, 2
        // Predicated region
        $region57: #{tpu_custom_call.1} parent=55 // pred_check
          %p467 = pneg %p230
        $region58: #{tpu_custom_call.1} parent=55 // pred_check_branch
          %469 = sbr.rel (%p467) target = $region60
        $region59: #{tpu_custom_call.1} parent=55 // pred_region
          %s470 = sand.u32 %s215, 1
          %s471 = scalar_lea.sflag [#allocation7], %s470
          %s472 = sand.u32 %s215, 1
          %s473 = scalar_lea.vmem [#allocation10], %s472
          %475 = dma.done %s471, 16
        $region60: #{tpu_custom_call.1} parent=55 // pred_fallthru
          _
      $region56: #{tpu_custom_call.1} parent=5 // pred_fallthru
        _
    $region6: #{tpu_custom_call.1} parent=1 // loop_footer
      %s39 = sadd.s32 1, %s35
    $region7: #{tpu_custom_call.1} parent=1 // loop_footer_branch
      %34 = sbr.rel target = $region3
    $region8: #{tpu_custom_call.1} parent=1 // loop_exit
      _
    %476 = vsyncpa [#allocation6], 1
    %s477 = scalar_lea.sflag [#allocation6], 1
    %478 = vsyncpa %s477, 1
    %479 = vsyncpa [#allocation9], 1
    %s480 = scalar_lea.sflag [#allocation9], 1
    %481 = vsyncpa %s480, 1
    %482 = vsyncpa [#allocation7], 1
    %s483 = scalar_lea.sflag [#allocation7], 1
    %484 = vsyncpa %s483, 1

</llo_original>
